<compile_context>
chip_gen: v5e
topology: v5e:2x2
jax: 0.10.0
libtpu: 0.0.40
codegen_flags: <defaults>
</compile_context>

<pallas_src>
import functools
import math

import jax
import jax.numpy as jnp
from jax.experimental import pallas as pl
from jax.experimental.pallas import tpu as pltpu


# ----------------------------------------------------------------------------
# Fused kernel for one row tile:
#   x:   [TM, H]   residual: [TM, H]
#   w:   [H, H]    b/gamma/beta: [1, H]
#   out: [TM, H] = LayerNorm(x @ w + b + residual) * gamma + beta
# ----------------------------------------------------------------------------
def self_output_kernel(x_ref, res_ref, w_ref, b_ref, g_ref, beta_ref, o_ref,
                       *, eps):
    # Dense projection on the MXU (bf16 or f32 operands), f32 accumulation.
    h = jnp.dot(x_ref[...], w_ref[...], preferred_element_type=jnp.float32)
    h = h + b_ref[...].astype(jnp.float32)
    # TODO(synk): training-mode dropout would be applied to `h` here.
    h = h + res_ref[...].astype(jnp.float32)

    # LayerNorm over the hidden (last) axis — biased variance, like torch.
    mean = jnp.mean(h, axis=-1, keepdims=True)
    c = h - mean
    var = jnp.mean(c * c, axis=-1, keepdims=True)
    inv = jax.lax.rsqrt(var + eps)                       # EUP slot (free-ish)
    y = c * inv * g_ref[...].astype(jnp.float32) + beta_ref[...].astype(jnp.float32)
    o_ref[...] = y.astype(o_ref.dtype)


def bert_self_output(hidden_states, input_tensor, params, *, eps=1e-12,
                     max_tile_m=512, vmem_limit_bytes=32 * 1024 * 1024):
    """hidden_states, input_tensor: [B, S, H]. Returns [B, S, H] in the
    activation dtype. params: dict(w=[H,H], b=[1,H], gamma=[1,H], beta=[1,H])."""
    B, S, H = hidden_states.shape
    assert input_tensor.shape == (B, S, H)

    M = B * S
    x2 = hidden_states.reshape(M, H)
    r2 = input_tensor.reshape(M, H)

    # Row tile: multiple of 8 (sublane), capped at max_tile_m.  No wrapper-side
    # padding: the last tile may be partial — LayerNorm is per-row and the
    # out-of-bounds stores are masked, so that is safe (keep the kernel free of
    # cross-row ops within a tile).
    max_tile_m = max(8, (max_tile_m // 8) * 8)
    tile_m = min(max_tile_m, ((M + 7) // 8) * 8)
    n_tiles = pl.cdiv(M, tile_m)

    row_spec = pl.BlockSpec((tile_m, H), lambda i: (i, 0))
    w_spec = pl.BlockSpec((H, H), lambda i: (0, 0))      # constant -> DMA'd once
    vec_spec = pl.BlockSpec((1, H), lambda i: (0, 0))    # constant -> DMA'd once

    act_bytes = hidden_states.dtype.itemsize
    w_bytes = params["w"].dtype.itemsize
    cost = pl.CostEstimate(
        flops=2 * M * H * H,
        transcendentals=M,                               # one rsqrt per row
        bytes_accessed=3 * M * H * act_bytes + H * H * w_bytes + 3 * H * 4,
    )

    out = pl.pallas_call(
        functools.partial(self_output_kernel, eps=eps),
        out_shape=jax.ShapeDtypeStruct((M, H), hidden_states.dtype),
        grid_spec=pltpu.PrefetchScalarGridSpec(
            num_scalar_prefetch=0,
            grid=(n_tiles,),
            in_specs=[row_spec, row_spec, w_spec, vec_spec, vec_spec, vec_spec],
            out_specs=row_spec,
        ),
        compiler_params=pltpu.CompilerParams(
            dimension_semantics=("parallel",),
            vmem_limit_bytes=vmem_limit_bytes,
        ),
        cost_estimate=cost,
    )(x2, r2, params["w"], params["b"], params["gamma"], params["beta"])

    return out.reshape(B, S, H)


def init_params(key, hidden_size):
    """Deterministic params. W stored as [in, out] (nn.Linear weight^T)."""
    ks = jax.random.split(key, 2)
    scale = 1.0 / math.sqrt(hidden_size)
    w = jax.random.uniform(ks[0], (hidden_size, hidden_size),
                           jnp.float32, -scale, scale)
    b = jax.random.uniform(ks[1], (1, hidden_size), jnp.float32, -scale, scale)
    gamma = jnp.ones((1, hidden_size), jnp.float32)
    beta = jnp.zeros((1, hidden_size), jnp.float32)
    return dict(w=w, b=b, gamma=gamma, beta=beta)


def reference_self_output(hidden_states, input_tensor, params, eps=1e-12):
    """Pure-JAX f32 reference (eval-mode dropout = identity)."""
    h = hidden_states @ params["w"] + params["b"][0]
    h = h + input_tensor
    mean = h.mean(axis=-1, keepdims=True)
    var = ((h - mean) ** 2).mean(axis=-1, keepdims=True)
    y = (h - mean) / jnp.sqrt(var + eps)
    return y * params["gamma"][0] + params["beta"][0]


if __name__ == "__main__":
    # Small shapes consistent with the module: batch=2, seq=8, hidden=32.
    B, S, H = 2, 8, 32
    EPS = 1e-12

    key = jax.random.PRNGKey(0)
    k_x, k_r, k_p = jax.random.split(key, 3)
    hidden_states = jax.random.normal(k_x, (B, S, H), jnp.float32)
    input_tensor = jax.random.normal(k_r, (B, S, H), jnp.float32)
    params = init_params(k_p, H)

    ref = reference_self_output(hidden_states, input_tensor, params, eps=EPS)

    # f32 path — tight tolerance vs. the f32 reference.
    out = jax.block_until_ready(
        bert_self_output(hidden_states, input_tensor, params, eps=EPS))
    assert out.shape == (B, S, H)
    assert out.dtype == hidden_states.dtype
    assert jnp.allclose(out, ref, atol=1e-5, rtol=1e-5), "f32 mismatch vs reference"

    # bf16 activation/weight path (the recommended production config: halves
    # the HBM byte streams, bf16 MXU matmul, f32 LayerNorm stats).  Looser
    # tolerance is expected precision loss, not a bug.
    hs_bf = hidden_states.astype(jnp.bfloat16)
    it_bf = input_tensor.astype(jnp.bfloat16)
    params_bf = dict(params, w=params["w"].astype(jnp.bfloat16))
    out_bf = jax.block_until_ready(
        bert_self_output(hs_bf, it_bf, params_bf, eps=EPS))
    assert out_bf.dtype == jnp.bfloat16
    assert jnp.allclose(out_bf.astype(jnp.float32), ref, atol=5e-2, rtol=5e-2), \
        "bf16 mismatch vs reference"

    print("KERNEL_OK")
</pallas_src>

<mosaic_0001>
module attributes {stable_mosaic.version = 11 : i64} {
  func.func @self_output_kernel(%arg0: i32, %arg1: memref<16x32xf32, #tpu.memory_space<vmem>>, %arg2: memref<16x32xf32, #tpu.memory_space<vmem>>, %arg3: memref<32x32xf32, #tpu.memory_space<vmem>>, %arg4: memref<1x32xf32, #tpu.memory_space<vmem>>, %arg5: memref<1x32xf32, #tpu.memory_space<vmem>>, %arg6: memref<1x32xf32, #tpu.memory_space<vmem>>, %arg7: memref<16x32xf32, #tpu.memory_space<vmem>>) attributes {dimension_semantics = [#tpu.dimension_semantics<parallel>], iteration_bounds = array<i64: 1>, scalar_prefetch = 0 : i64, scratch_operands = 0 : i64, tpu.core_type = #tpu.core_type<tc>, window_params = [{transform_indices = @transform_0, window_bounds = array<i64: 16, 32>}, {transform_indices = @transform_1, window_bounds = array<i64: 16, 32>}, {pipeline_mode = #tpu.pipeline_mode<synchronous>, transform_indices = @transform_2, window_bounds = array<i64: 32, 32>}, {pipeline_mode = #tpu.pipeline_mode<synchronous>, transform_indices = @transform_3, window_bounds = array<i64: 1, 32>}, {pipeline_mode = #tpu.pipeline_mode<synchronous>, transform_indices = @transform_4, window_bounds = array<i64: 1, 32>}, {pipeline_mode = #tpu.pipeline_mode<synchronous>, transform_indices = @transform_5, window_bounds = array<i64: 1, 32>}, {transform_indices = @transform_6, window_bounds = array<i64: 16, 32>}]} {
    %c0 = arith.constant 0 : index
    %c0_0 = arith.constant 0 : index
    %0 = vector.load %arg1[%c0, %c0_0] : memref<16x32xf32, #tpu.memory_space<vmem>>, vector<16x32xf32>
    %c0_1 = arith.constant 0 : index
    %c0_2 = arith.constant 0 : index
    %1 = vector.load %arg3[%c0_1, %c0_2] : memref<32x32xf32, #tpu.memory_space<vmem>>, vector<32x32xf32>
    %cst = arith.constant dense<0.000000e+00> : vector<16x32xf32>
    %2 = tpu.matmul %0, %1, %cst {dimension_numbers = #tpu.dot_dimension_numbers<[1], [0], [0], [1], [0, 0, 1, 1], [], []>} : vector<16x32xf32>, vector<32x32xf32>, vector<16x32xf32> -> vector<16x32xf32>
    %c0_3 = arith.constant 0 : index
    %c0_4 = arith.constant 0 : index
    %3 = vector.load %arg4[%c0_3, %c0_4] : memref<1x32xf32, #tpu.memory_space<vmem>>, vector<1x32xf32>
    %4 = vector.broadcast %3 : vector<1x32xf32> to vector<16x32xf32>
    %5 = arith.addf %2, %4 : vector<16x32xf32>
    %c0_5 = arith.constant 0 : index
    %c0_6 = arith.constant 0 : index
    %6 = vector.load %arg2[%c0_5, %c0_6] : memref<16x32xf32, #tpu.memory_space<vmem>>, vector<16x32xf32>
    %7 = arith.addf %5, %6 : vector<16x32xf32>
    %cst_7 = arith.constant dense<0.000000e+00> : vector<16xf32>
    %8 = vector.multi_reduction <add>, %7, %cst_7 [1] : vector<16x32xf32> to vector<16xf32>
    %9 = vector.shape_cast %8 : vector<16xf32> to vector<16x1xf32>
    %cst_8 = arith.constant 3.200000e+01 : f32
    %10 = vector.broadcast %cst_8 : f32 to vector<16x1xf32>
    %11 = arith.divf %9, %10 : vector<16x1xf32>
    %12 = vector.broadcast %11 : vector<16x1xf32> to vector<16x32xf32>
    %13 = arith.subf %7, %12 : vector<16x32xf32>
    %14 = arith.mulf %13, %13 : vector<16x32xf32>
    %cst_9 = arith.constant dense<0.000000e+00> : vector<16xf32>
    %15 = vector.multi_reduction <add>, %14, %cst_9 [1] : vector<16x32xf32> to vector<16xf32>
    %16 = vector.shape_cast %15 : vector<16xf32> to vector<16x1xf32>
    %cst_10 = arith.constant 3.200000e+01 : f32
    %17 = vector.broadcast %cst_10 : f32 to vector<16x1xf32>
    %18 = arith.divf %16, %17 : vector<16x1xf32>
    %cst_11 = arith.constant 9.99999996E-13 : f32
    %19 = vector.broadcast %cst_11 : f32 to vector<16x1xf32>
    %20 = arith.addf %18, %19 : vector<16x1xf32>
    %21 = math.rsqrt %20 : vector<16x1xf32>
    %22 = vector.broadcast %21 : vector<16x1xf32> to vector<16x32xf32>
    %23 = arith.mulf %13, %22 : vector<16x32xf32>
    %c0_12 = arith.constant 0 : index
    %c0_13 = arith.constant 0 : index
    %24 = vector.load %arg5[%c0_12, %c0_13] : memref<1x32xf32, #tpu.memory_space<vmem>>, vector<1x32xf32>
    %25 = vector.broadcast %24 : vector<1x32xf32> to vector<16x32xf32>
    %26 = arith.mulf %23, %25 : vector<16x32xf32>
    %c0_14 = arith.constant 0 : index
    %c0_15 = arith.constant 0 : index
    %27 = vector.load %arg6[%c0_14, %c0_15] : memref<1x32xf32, #tpu.memory_space<vmem>>, vector<1x32xf32>
    %28 = vector.broadcast %27 : vector<1x32xf32> to vector<16x32xf32>
    %29 = arith.addf %26, %28 : vector<16x32xf32>
    %c0_16 = arith.constant 0 : index
    %c0_17 = arith.constant 0 : index
    %30 = vector.load %arg7[%c0_16, %c0_17] : memref<16x32xf32, #tpu.memory_space<vmem>>, vector<16x32xf32>
    tpu.vector_store %arg7[%c0_16, %c0_17], %29 {strides = array<i32>} : memref<16x32xf32, #tpu.memory_space<vmem>>, vector<16x32xf32>,
    return
  }
  func.func @transform_0(%arg0: i32) -> (i32, i32) {
    %c0_i32 = arith.constant 0 : i32
    %c0_i32_0 = arith.constant 0 : i32
    return %arg0, %c0_i32 : i32, i32
  }
  func.func @transform_1(%arg0: i32) -> (i32, i32) {
    %c0_i32 = arith.constant 0 : i32
    %c0_i32_0 = arith.constant 0 : i32
    return %arg0, %c0_i32 : i32, i32
  }
  func.func @transform_2(%arg0: i32) -> (i32, i32) {
    %c0_i32 = arith.constant 0 : i32
    %c0_i32_0 = arith.constant 0 : i32
    %c0_i32_1 = arith.constant 0 : i32
    return %c0_i32, %c0_i32_0 : i32, i32
  }
  func.func @transform_3(%arg0: i32) -> (i32, i32) {
    %c0_i32 = arith.constant 0 : i32
    %c0_i32_0 = arith.constant 0 : i32
    %c0_i32_1 = arith.constant 0 : i32
    return %c0_i32, %c0_i32_0 : i32, i32
  }
  func.func @transform_4(%arg0: i32) -> (i32, i32) {
    %c0_i32 = arith.constant 0 : i32
    %c0_i32_0 = arith.constant 0 : i32
    %c0_i32_1 = arith.constant 0 : i32
    return %c0_i32, %c0_i32_0 : i32, i32
  }
  func.func @transform_5(%arg0: i32) -> (i32, i32) {
    %c0_i32 = arith.constant 0 : i32
    %c0_i32_0 = arith.constant 0 : i32
    %c0_i32_1 = arith.constant 0 : i32
    return %c0_i32, %c0_i32_0 : i32, i32
  }
  func.func @transform_6(%arg0: i32) -> (i32, i32) {
    %c0_i32 = arith.constant 0 : i32
    %c0_i32_0 = arith.constant 0 : i32
    return %arg0, %c0_i32 : i32, i32
  }
}

</mosaic_0001>

<llo_original>
// kernel: tpu_custom_call.1
$region0: #{tpu_custom_call.1}
  #allocation0 [shape = 'u32[]', space=smem, size = 0x4, offset = 0x4, fixed_abs, tag = 'smem constant byte address 0x4 - core index']
  #allocation1 [shape = 'u32[72,128]{1,0:T(1,128)}', space=vmem, size = 0x9000, scoped, tag = 'internal scratch']
  %s0 = inlined_call_operand.hbm [shape: f32[16,32], index: 0, kind: input, shape index: {}]
  %s1 = inlined_call_operand.hbm [shape: f32[16,32], index: 1, kind: input, shape index: {}]
  %s2 = inlined_call_operand.hbm [shape: f32[32,32], index: 2, kind: input, shape index: {}]
  %s3 = inlined_call_operand.vmem [shape: f32[1,32], index: 3, kind: input, shape index: {}]
  %s4 = inlined_call_operand.vmem [shape: f32[1,32], index: 4, kind: input, shape index: {}]
  %s5 = inlined_call_operand.vmem [shape: f32[1,32], index: 5, kind: input, shape index: {}]
  %s6 = inlined_call_operand.hbm [shape: f32[16,32], index: 6, kind: output, shape index: {}]
  %s7 = sld [smem:[#allocation0]]
  $region46: #{tpu_custom_call.1} parent=0
    _
  %s9 = ssub.s32 1, %s7
  %s10 = scalar_select 0, %s9, %s7
  $region1: #{tpu_custom_call.1} parent=0
    #allocation2 [shape = 'u8[8192]{0}', space=vmem, size = 0x2000, scoped, tag = 'input window, operand 0, single buffered']
    #allocation3 [shape = 's32[1]{0}', space=sflag, size = 0x4, scoped, tag = 'scoped memory for tpu_custom_call.1']
    #allocation4 [shape = 's32[1]{0}', space=sflag, size = 0x4, scoped, tag = 'scoped memory for tpu_custom_call.1']
    #allocation5 [shape = 'u8[8192]{0}', space=vmem, size = 0x2000, scoped, tag = 'input window, operand 1, single buffered']
    #allocation6 [shape = 's32[1]{0}', space=sflag, size = 0x4, scoped, tag = 'scoped memory for tpu_custom_call.1']
    #allocation7 [shape = 'u8[16384]{0}', space=vmem, size = 0x4000, scoped, tag = 'input window, operand 2, single buffered']
    #allocation8 [shape = 'u8[8192]{0}', space=vmem, size = 0x2000, scoped, tag = 'output window, operand 0, single buffered']
    %11 = vsyncpa [#allocation3], 0
    %12 = vsyncpa [#allocation6], 0
    %13 = vsyncpa [#allocation4], 0
    // Predicated region
    $region2: #{tpu_custom_call.1} parent=1 // pred_check
      _
    $region3: #{tpu_custom_call.1} parent=1 // pred_check_branch
      %15 = sbr.rel (0) target = $region5
    $region4: #{tpu_custom_call.1} parent=1 // pred_region
      %17 = vsyncadd [#allocation3], 0
      %s18 = sshll.u32 %s0, 4
      %s19 = int_to_ptr.hbm [resolvable:$true] %s18
      %s20 = sshll.u32 [#allocation2], 4
      %s21 = int_to_ptr.vmem [resolvable:$true] %s20
      %26 = dma.hbm_to_vmem [thread:$0]  %s19, 256, %s21, [#allocation3], 128, 128, 8
    $region5: #{tpu_custom_call.1} parent=1 // pred_fallthru
      _
    // Predicated region
    $region6: #{tpu_custom_call.1} parent=1 // pred_check
      _
    $region7: #{tpu_custom_call.1} parent=1 // pred_check_branch
      %28 = sbr.rel (0) target = $region9
    $region8: #{tpu_custom_call.1} parent=1 // pred_region
      %30 = vsyncadd [#allocation6], 0
      %s31 = sshll.u32 %s1, 4
      %s32 = int_to_ptr.hbm [resolvable:$true] %s31
      %s33 = sshll.u32 [#allocation5], 4
      %s34 = int_to_ptr.vmem [resolvable:$true] %s33
      %39 = dma.hbm_to_vmem [thread:$0]  %s32, 256, %s34, [#allocation6], 128, 128, 8
    $region9: #{tpu_custom_call.1} parent=1 // pred_fallthru
      _
    // Predicated region
    $region10: #{tpu_custom_call.1} parent=1 // pred_check
      _
    $region11: #{tpu_custom_call.1} parent=1 // pred_check_branch
      %41 = sbr.rel (0) target = $region13
    $region12: #{tpu_custom_call.1} parent=1 // pred_region
      %43 = vsyncadd [#allocation6], 0
      %s44 = sshll.u32 %s2, 4
      %s45 = int_to_ptr.hbm [resolvable:$true] %s44
      %s46 = sshll.u32 [#allocation7], 4
      %s47 = int_to_ptr.vmem [resolvable:$true] %s46
      %52 = dma.hbm_to_vmem [thread:$0]  %s45, 512, %s47, [#allocation6], 128, 128, 8
    $region13: #{tpu_custom_call.1} parent=1 // pred_fallthru
      _
    // Predicated region
    $region14: #{tpu_custom_call.1} parent=1 // pred_check
      _
    $region15: #{tpu_custom_call.1} parent=1 // pred_check_branch
      %54 = sbr.rel (0) target = $region17
    $region16: #{tpu_custom_call.1} parent=1 // pred_region
      _
    $region17: #{tpu_custom_call.1} parent=1 // pred_fallthru
      _
    // Predicated region
    $region18: #{tpu_custom_call.1} parent=1 // pred_check
      _
    $region19: #{tpu_custom_call.1} parent=1 // pred_check_branch
      %56 = sbr.rel (0) target = $region21
    $region20: #{tpu_custom_call.1} parent=1 // pred_region
      _
    $region21: #{tpu_custom_call.1} parent=1 // pred_fallthru
      _
    // Predicated region
    $region22: #{tpu_custom_call.1} parent=1 // pred_check
      _
    $region23: #{tpu_custom_call.1} parent=1 // pred_check_branch
      %58 = sbr.rel (0) target = $region25
    $region24: #{tpu_custom_call.1} parent=1 // pred_region
      _
    $region25: #{tpu_custom_call.1} parent=1 // pred_fallthru
      _
    // Predicated region
    $region26: #{tpu_custom_call.1} parent=1 // pred_check
      _
    $region27: #{tpu_custom_call.1} parent=1 // pred_check_branch
      %60 = sbr.rel (0) target = $region29
    $region28: #{tpu_custom_call.1} parent=1 // pred_region
      %62 = dma.done [#allocation3], 256
    $region29: #{tpu_custom_call.1} parent=1 // pred_fallthru
      _
    // Predicated region
    $region30: #{tpu_custom_call.1} parent=1 // pred_check
      _
    $region31: #{tpu_custom_call.1} parent=1 // pred_check_branch
      %64 = sbr.rel (0) target = $region33
    $region32: #{tpu_custom_call.1} parent=1 // pred_region
      %66 = dma.done [#allocation6], 256
    $region33: #{tpu_custom_call.1} parent=1 // pred_fallthru
      _
    // Predicated region
    $region34: #{tpu_custom_call.1} parent=1 // pred_check
      _
    $region35: #{tpu_custom_call.1} parent=1 // pred_check_branch
      %68 = sbr.rel (0) target = $region37
    $region36: #{tpu_custom_call.1} parent=1 // pred_region
      %70 = dma.done [#allocation6], 512
    $region37: #{tpu_custom_call.1} parent=1 // pred_fallthru
      _
    %v71 = vld [vmem:[#allocation2] sm:$0xff]
    %v72 = vld [vmem:[#allocation2 + $0x8] sm:$0xff]
    %v73 = vld [vmem:[#allocation7] sm:$0xff]
    %v74 = vld [vmem:[#allocation7 + $0x8] sm:$0xff]
    %v75 = vld [vmem:[#allocation7 + $0x10] sm:$0xff]
    %v76 = vld [vmem:[#allocation7 + $0x18] sm:$0xff]
    %v77 = vld [vmem:[%s3] sm:$0x1]
    %v79 = vperm.slane %v77, 0
    %vm81 = vcmask 261120
    %v83 = vsel %vm81, %v71, 0
    %v86 = vsel %vm81, %v72, 0
    %88 = vmatpush.msra.mxu0 0.0
    %89 = vmatpush.msra.mxu0 0.0
    %90 = vmatpush.msra.mxu0 0.0
    %91 = vmatpush.msra.mxu0 0.0
    %92 = vmatpush.msra.mxu0 0.0
    %93 = vmatpush.msra.mxu0 0.0
    %94 = vmatpush.msra.mxu0 0.0
    %95 = vmatpush.msra.mxu0 0.0
    %96 = vmatpush.msra.mxu0 0.0
    %97 = vmatpush.msra.mxu0 0.0
    %98 = vmatpush.msra.mxu0 0.0
    %99 = vmatpush.msra.mxu0 0.0
    %100 = vmatpush.msra.mxu0 %v76
    %101 = vmatpush.msra.mxu0 %v75
    %102 = vmatpush.msra.mxu0 %v74
    %103 = vmatpush.msra.mxu0 %v73
    %104 = vmatmul.f32.gmra.mxu0 %v83
    %v105 = vpop.f32.mrf.mxu0
    %v106 = vadd.f32 %v79, %v105
    %107 = vmatmul.f32.gmra.mxu0 %v86
    %v108 = vpop.f32.mrf.mxu0
    %v109 = vadd.f32 %v79, %v108
    %110 = vdwg.mxu0
    %v111 = vld [vmem:[#allocation5] sm:$0xff]
    %v112 = vld [vmem:[#allocation5 + $0x8] sm:$0xff]
    %v113 = vadd.f32 %v106, %v111
    %v114 = vadd.f32 %v109, %v112
    %v115 = vsel %vm81, %v113, 0.0
    %116 = vadd.xlane.f32.xlu0 %v115
    %v117 = vpop.xlane.xlu0 %116
    %v118 = vsel %vm81, %v114, 0.0
    %119 = vadd.xlane.f32.xlu0 %v118
    %v120 = vpop.xlane.xlu0 %119
    %v121 = vrcp.pop 32.0
    %v122 = vmul.f32 32.0, %v121
    %v123 = vsub.f32 1.0, %v122
    %v124 = vmul.f32 %v121, %v123
    %v125 = vadd.f32 %v121, %v124
    %vm126 = vweird.f32 %v121
    %v127 = vsel %vm126, %v121, %v125
    %v128 = vmul.f32 %v117, %v127
    %v129 = vmul.f32 %v120, %v127
    %v130 = vsub.f32 %v113, %v128
    %v131 = vsub.f32 %v114, %v129
    %v132 = vmul.f32 %v130, %v130
    %v133 = vmul.f32 %v131, %v131
    %v134 = vsel %vm81, %v132, 0.0
    %135 = vadd.xlane.f32.xlu0 %v134
    %v136 = vpop.xlane.xlu0 %135
    %v137 = vsel %vm81, %v133, 0.0
    %138 = vadd.xlane.f32.xlu0 %v137
    %v139 = vpop.xlane.xlu0 %138
    %v140 = vmul.f32 %v136, %v127
    %v141 = vmul.f32 %v139, %v127
    %v142 = vadd.f32 %v140, 1e-12
    %v143 = vadd.f32 %v141, 1e-12
    %v144 = vrsqrt.pop %v142
    %v145 = vmul.f32 %v144, %v142
    %v146 = vmul.f32 %v145, %v144
    %v147 = vmul.f32 0.5, %v146
    %v148 = vsub.f32 1.5, %v147
    %v149 = vmul.f32 %v144, %v148
    %vm150 = vweird.f32 %v142
    %vm151 = vweird.f32 %v144
    %vm152 = vmor %vm150, %vm151
    %v153 = vsel %vm152, %v144, %v149
    %v154 = vrsqrt.pop %v143
    %v155 = vmul.f32 %v154, %v143
    %v156 = vmul.f32 %v155, %v154
    %v157 = vmul.f32 0.5, %v156
    %v158 = vsub.f32 1.5, %v157
    %v159 = vmul.f32 %v154, %v158
    %vm160 = vweird.f32 %v143
    %vm161 = vweird.f32 %v154
    %vm162 = vmor %vm160, %vm161
    %v163 = vsel %vm162, %v154, %v159
    %v164 = vmul.f32 %v130, %v153
    %v165 = vmul.f32 %v131, %v163
    %v166 = vld [vmem:[%s4] sm:$0x1]
    %v168 = vperm.slane %v166, 0
    %v170 = vmul.f32 %v164, %v168
    %v171 = vmul.f32 %v165, %v168
    %v172 = vld [vmem:[%s5] sm:$0x1]
    %v174 = vperm.slane %v172, 0
    %v176 = vadd.f32 %v170, %v174
    %v177 = vadd.f32 %v171, %v174
    %178 = vst.msk [vmem:[#allocation8] sm:$0xff] %vm81, %v176
    %179 = vst.msk [vmem:[#allocation8 + $0x8] sm:$0xff] %vm81, %v177
    // Predicated region
    $region38: #{tpu_custom_call.1} parent=1 // pred_check
      _
    $region39: #{tpu_custom_call.1} parent=1 // pred_check_branch
      %181 = sbr.rel (0) target = $region41
    $region40: #{tpu_custom_call.1} parent=1 // pred_region
      %183 = vsyncadd [#allocation4], 0
      %s184 = sshll.u32 [#allocation8], 4
      %s185 = int_to_ptr.vmem [resolvable:$true] %s184
      %s186 = sshll.u32 %s6, 4
      %s187 = int_to_ptr.hbm [resolvable:$true] %s186
      %192 = dma.vmem_to_hbm [thread:$0]  %s185, 256, %s187, [#allocation4], 128, 128, 8
    $region41: #{tpu_custom_call.1} parent=1 // pred_fallthru
      _
    // Predicated region
    $region42: #{tpu_custom_call.1} parent=1 // pred_check
      _
    $region43: #{tpu_custom_call.1} parent=1 // pred_check_branch
      %194 = sbr.rel (0) target = $region45
    $region44: #{tpu_custom_call.1} parent=1 // pred_region
      %196 = dma.done [#allocation4], 256
    $region45: #{tpu_custom_call.1} parent=1 // pred_fallthru
      _
    %197 = vsyncpa [#allocation3], 1
    %198 = vsyncpa [#allocation6], 1
    %199 = vsyncpa [#allocation4], 1

</llo_original>
